<compile_context>
chip_gen: v6e
topology: v6e:2x2x1
jax: 0.10.0
libtpu: 0.0.40
codegen_flags: <defaults>
</compile_context>

<pallas_src>
import jax
import jax.numpy as jnp
from jax import lax
from jax.experimental import pallas as pl
from jax.experimental.pallas import tpu as pltpu
import numpy as np

C_IN = 64
C_OUT = 64
KSIZE = 3


def conv_relu_kernel(xa_ref, xb0_ref, xb1_ref, w_ref, o_ref):
    # xa_ref : (1, TH, W+2, C_IN)  main padded-row slab (bf16)
    # xb0_ref: (1, 1,  W+2, C_IN)  halo row TH          (bf16)
    # xb1_ref: (1, 1,  W+2, C_IN)  halo row TH+1        (bf16)
    # w_ref  : (KSIZE, KSIZE*C_IN, C_OUT)  weights as (kh, kw*cin, cout) (bf16)
    # o_ref  : (1, TH, W, C_OUT)   f32 output tile
    th = o_ref.shape[1]
    w_out = o_ref.shape[2]

    # (TH+2, W+2, C) padded slab for this tile (concat along untiled major dim).
    slab = jnp.concatenate([xa_ref[0], xb0_ref[0], xb1_ref[0]], axis=0)

    # Width-only im2col, built once per tile: K = KSIZE * C_IN = 192.
    patches = jnp.concatenate(
        [slab[:, kw:kw + w_out, :] for kw in range(KSIZE)], axis=-1)

    # 3 deep matmuls (one per kh) with f32 accumulation on the MXU.
    acc = None
    for kh in range(KSIZE):
        lhs = patches[kh:kh + th].reshape(th * w_out, KSIZE * C_IN)
        part = jnp.dot(lhs, w_ref[kh], preferred_element_type=jnp.float32)
        acc = part if acc is None else acc + part

    out = jnp.maximum(acc, 0.0).reshape(th, w_out, C_OUT)
    o_ref[0] = out.astype(o_ref.dtype)


def _pick_tile_h(H, W):
    """Largest divisor of H whose bf16 input slab stays around <=1 MiB so the
    double-buffered blocks fit easily on every chip (incl. v7x's 64 MiB)."""
    row_bytes = (W + 2) * C_IN * 2          # one padded bf16 input row
    budget_rows = max(1, (1 << 20) // max(1, row_bytes))
    best = 1
    for cand in range(1, H + 1):
        if H % cand == 0 and cand <= budget_rows:
            best = cand
    return best


def conv_relu_block(x_nchw, w_hwio, tile_h=None):
    """x_nchw: (N, 64, H, W) float32; w_hwio: (3, 3, 64, 64) float32."""
    N, C, H, W = x_nchw.shape
    assert C == C_IN
    if tile_h is None:
        tile_h = _pick_tile_h(H, W)
    if H % tile_h != 0:
        tile_h = H
    n_tiles = H // tile_h
    wp = W + 2

    # TODO(synk): across the full 18-layer VDSR stack keep activations NHWC
    # (bf16) end-to-end and fold padding into the kernel (edge-tile masking)
    # instead of a per-layer transpose+pad HBM pass.
    x_nhwc = jnp.transpose(x_nchw, (0, 2, 3, 1)).astype(jnp.bfloat16)
    x_pad = jnp.pad(x_nhwc, ((0, 0), (1, 1), (1, 1), (0, 0)))  # (N,H+2,W+2,C)

    # (kh, kw, cin, cout) -> (kh, kw*cin, cout): matches the width-im2col order.
    w_k = w_hwio.reshape(KSIZE, KSIZE * C_IN, C_OUT).astype(jnp.bfloat16)

    out_nhwc = pl.pallas_call(
        conv_relu_kernel,
        out_shape=jax.ShapeDtypeStruct((N, H, W, C_OUT), jnp.float32),
        grid_spec=pltpu.PrefetchScalarGridSpec(
            num_scalar_prefetch=0,
            grid=(N, n_tiles),
            in_specs=[
                # main TH-row slab of padded rows [i*TH, i*TH+TH)
                pl.BlockSpec((1, tile_h, wp, C_IN),
                             lambda n, i: (n, i, 0, 0)),
                # halo rows i*TH+TH and i*TH+TH+1 (single-row blocks)
                pl.BlockSpec((1, 1, wp, C_IN),
                             lambda n, i: (n, (i + 1) * tile_h, 0, 0)),
                pl.BlockSpec((1, 1, wp, C_IN),
                             lambda n, i: (n, (i + 1) * tile_h + 1, 0, 0)),
                # weights stay resident (constant index_map)
                pl.BlockSpec((KSIZE, KSIZE * C_IN, C_OUT),
                             lambda n, i: (0, 0, 0)),
            ],
            out_specs=pl.BlockSpec((1, tile_h, W, C_OUT),
                                   lambda n, i: (n, i, 0, 0)),
        ),
        compiler_params=pltpu.CompilerParams(
            dimension_semantics=("parallel", "parallel"),
            vmem_limit_bytes=32 * 1024 * 1024,
        ),
    )(x_pad, x_pad, x_pad, w_k)

    # TODO(synk): a lane-dense (N, H, W*64) output presentation would make the
    # final store unmasked, at the cost of an in-kernel minor-dim reshape.
    return jnp.transpose(out_nhwc, (0, 3, 1, 2))


if __name__ == "__main__":
    key = jax.random.PRNGKey(0)
    kx, kw_key = jax.random.split(key)

    # Small but module-consistent shapes: channels must be 64.
    N, H, W = 2, 16, 16
    x = jax.random.normal(kx, (N, C_IN, H, W), dtype=jnp.float32)

    # VDSR-style kaiming init, sqrt(2 / (k*k*c_out)).
    fan = KSIZE * KSIZE * C_OUT
    w_hwio = jax.random.normal(kw_key, (KSIZE, KSIZE, C_IN, C_OUT),
                               dtype=jnp.float32) * jnp.sqrt(2.0 / fan)

    # tile_h=8 -> 2 H-tiles per image: exercises the halo + tiling path.
    out = conv_relu_block(x, w_hwio, tile_h=8)
    out = jax.block_until_ready(out)

    # Reference on the same bf16-rounded operands (kernel feeds the MXU bf16
    # and accumulates in f32).
    xq = x.astype(jnp.bfloat16).astype(jnp.float32)
    wq = w_hwio.astype(jnp.bfloat16).astype(jnp.float32)
    w_oihw = jnp.transpose(wq, (3, 2, 0, 1))
    ref = lax.conv_general_dilated(
        xq, w_oihw, window_strides=(1, 1), padding=((1, 1), (1, 1)),
        dimension_numbers=("NCHW", "OIHW", "NCHW"),
        precision=lax.Precision.HIGHEST)
    ref = jnp.maximum(ref, 0.0)

    assert out.shape == (N, C_OUT, H, W)
    err = float(jnp.max(jnp.abs(out - ref)))
    assert np.allclose(np.asarray(out), np.asarray(ref),
                       atol=1e-2, rtol=1e-2), f"max abs err {err}"

    print("KERNEL_OK")
</pallas_src>

<mosaic_0001>
module attributes {stable_mosaic.version = 11 : i64} {
  func.func @conv_relu_kernel(%arg0: i32, %arg1: i32, %arg2: memref<1x8x18x64xbf16, #tpu.memory_space<vmem>>, %arg3: memref<1x1x18x64xbf16, #tpu.memory_space<vmem>>, %arg4: memref<1x1x18x64xbf16, #tpu.memory_space<vmem>>, %arg5: memref<3x192x64xbf16, #tpu.memory_space<vmem>>, %arg6: memref<1x8x16x64xf32, #tpu.memory_space<vmem>>) attributes {dimension_semantics = [#tpu.dimension_semantics<parallel>, #tpu.dimension_semantics<parallel>], iteration_bounds = array<i64: 2, 2>, scalar_prefetch = 0 : i64, scratch_operands = 0 : i64, tpu.core_type = #tpu.core_type<tc>, window_params = [{transform_indices = @transform_0, window_bounds = array<i64: 1, 8, 18, 64>}, {transform_indices = @transform_1, window_bounds = array<i64: 1, 1, 18, 64>}, {transform_indices = @transform_2, window_bounds = array<i64: 1, 1, 18, 64>}, {pipeline_mode = #tpu.pipeline_mode<synchronous>, transform_indices = @transform_3, window_bounds = array<i64: 3, 192, 64>}, {transform_indices = @transform_4, window_bounds = array<i64: 1, 8, 16, 64>}]} {
    %c0 = arith.constant 0 : index
    %c0_0 = arith.constant 0 : index
    %c0_1 = arith.constant 0 : index
    %c0_2 = arith.constant 0 : index
    %0 = vector.load %arg2[%c0, %c0_0, %c0_1, %c0_2] : memref<1x8x18x64xbf16, #tpu.memory_space<vmem>>, vector<1x8x18x64xbf16>
    %1 = vector.shape_cast %0 : vector<1x8x18x64xbf16> to vector<8x18x64xbf16>
    %c0_3 = arith.constant 0 : index
    %c0_4 = arith.constant 0 : index
    %c0_5 = arith.constant 0 : index
    %c0_6 = arith.constant 0 : index
    %2 = vector.load %arg3[%c0_3, %c0_4, %c0_5, %c0_6] : memref<1x1x18x64xbf16, #tpu.memory_space<vmem>>, vector<1x1x18x64xbf16>
    %3 = vector.shape_cast %2 : vector<1x1x18x64xbf16> to vector<1x18x64xbf16>
    %c0_7 = arith.constant 0 : index
    %c0_8 = arith.constant 0 : index
    %c0_9 = arith.constant 0 : index
    %c0_10 = arith.constant 0 : index
    %4 = vector.load %arg4[%c0_7, %c0_8, %c0_9, %c0_10] : memref<1x1x18x64xbf16, #tpu.memory_space<vmem>>, vector<1x1x18x64xbf16>
    %5 = vector.shape_cast %4 : vector<1x1x18x64xbf16> to vector<1x18x64xbf16>
    %6 = tpu.concatenate %1, %3, %5 in 0 : vector<8x18x64xbf16>, vector<1x18x64xbf16>, vector<1x18x64xbf16> -> vector<10x18x64xbf16>
    %7 = vector.extract_strided_slice %6 {offsets = [0, 0, 0], sizes = [10, 16, 64], strides = [1, 1, 1]} : vector<10x18x64xbf16> to vector<10x16x64xbf16>
    %8 = vector.extract_strided_slice %6 {offsets = [0, 1, 0], sizes = [10, 16, 64], strides = [1, 1, 1]} : vector<10x18x64xbf16> to vector<10x16x64xbf16>
    %9 = vector.extract_strided_slice %6 {offsets = [0, 2, 0], sizes = [10, 16, 64], strides = [1, 1, 1]} : vector<10x18x64xbf16> to vector<10x16x64xbf16>
    %10 = tpu.concatenate %7, %8, %9 in 2 : vector<10x16x64xbf16>, vector<10x16x64xbf16>, vector<10x16x64xbf16> -> vector<10x16x192xbf16>
    %11 = vector.extract_strided_slice %10 {offsets = [0, 0, 0], sizes = [8, 16, 192], strides = [1, 1, 1]} : vector<10x16x192xbf16> to vector<8x16x192xbf16>
    %12 = vector.shape_cast %11 : vector<8x16x192xbf16> to vector<128x192xbf16>
    %c0_11 = arith.constant 0 : index
    %c0_12 = arith.constant 0 : index
    %c0_13 = arith.constant 0 : index
    %13 = vector.load %arg5[%c0_11, %c0_12, %c0_13] : memref<3x192x64xbf16, #tpu.memory_space<vmem>>, vector<1x192x64xbf16>
    %14 = vector.shape_cast %13 : vector<1x192x64xbf16> to vector<192x64xbf16>
    %cst = arith.constant dense<0.000000e+00> : vector<128x64xf32>
    %15 = tpu.matmul %12, %14, %cst {dimension_numbers = #tpu.dot_dimension_numbers<[1], [0], [0], [1], [0, 0, 1, 1], [], []>} : vector<128x192xbf16>, vector<192x64xbf16>, vector<128x64xf32> -> vector<128x64xf32>
    %16 = vector.extract_strided_slice %10 {offsets = [1, 0, 0], sizes = [8, 16, 192], strides = [1, 1, 1]} : vector<10x16x192xbf16> to vector<8x16x192xbf16>
    %17 = vector.shape_cast %16 : vector<8x16x192xbf16> to vector<128x192xbf16>
    %c1 = arith.constant 1 : index
    %c0_14 = arith.constant 0 : index
    %c0_15 = arith.constant 0 : index
    %18 = vector.load %arg5[%c1, %c0_14, %c0_15] : memref<3x192x64xbf16, #tpu.memory_space<vmem>>, vector<1x192x64xbf16>
    %19 = vector.shape_cast %18 : vector<1x192x64xbf16> to vector<192x64xbf16>
    %cst_16 = arith.constant dense<0.000000e+00> : vector<128x64xf32>
    %20 = tpu.matmul %17, %19, %cst_16 {dimension_numbers = #tpu.dot_dimension_numbers<[1], [0], [0], [1], [0, 0, 1, 1], [], []>} : vector<128x192xbf16>, vector<192x64xbf16>, vector<128x64xf32> -> vector<128x64xf32>
    %21 = arith.addf %15, %20 : vector<128x64xf32>
    %22 = vector.extract_strided_slice %10 {offsets = [2, 0, 0], sizes = [8, 16, 192], strides = [1, 1, 1]} : vector<10x16x192xbf16> to vector<8x16x192xbf16>
    %23 = vector.shape_cast %22 : vector<8x16x192xbf16> to vector<128x192xbf16>
    %c2 = arith.constant 2 : index
    %c0_17 = arith.constant 0 : index
    %c0_18 = arith.constant 0 : index
    %24 = vector.load %arg5[%c2, %c0_17, %c0_18] : memref<3x192x64xbf16, #tpu.memory_space<vmem>>, vector<1x192x64xbf16>
    %25 = vector.shape_cast %24 : vector<1x192x64xbf16> to vector<192x64xbf16>
    %cst_19 = arith.constant dense<0.000000e+00> : vector<128x64xf32>
    %26 = tpu.matmul %23, %25, %cst_19 {dimension_numbers = #tpu.dot_dimension_numbers<[1], [0], [0], [1], [0, 0, 1, 1], [], []>} : vector<128x192xbf16>, vector<192x64xbf16>, vector<128x64xf32> -> vector<128x64xf32>
    %27 = arith.addf %21, %26 : vector<128x64xf32>
    %cst_20 = arith.constant 0.000000e+00 : f32
    %28 = vector.broadcast %cst_20 : f32 to vector<128x64xf32>
    %29 = arith.maximumf %27, %28 : vector<128x64xf32>
    %30 = vector.shape_cast %29 : vector<128x64xf32> to vector<8x16x64xf32>
    %c0_21 = arith.constant 0 : index
    %c0_22 = arith.constant 0 : index
    %c0_23 = arith.constant 0 : index
    %c0_24 = arith.constant 0 : index
    %31 = vector.load %arg6[%c0_21, %c0_22, %c0_23, %c0_24] : memref<1x8x16x64xf32, #tpu.memory_space<vmem>>, vector<1x8x16x64xf32>
    %32 = vector.shape_cast %31 : vector<1x8x16x64xf32> to vector<8x16x64xf32>
    %33 = vector.shape_cast %30 : vector<8x16x64xf32> to vector<1x8x16x64xf32>
    tpu.vector_store %arg6[%c0_21, %c0_22, %c0_23, %c0_24], %33 {strides = array<i32>} : memref<1x8x16x64xf32, #tpu.memory_space<vmem>>, vector<1x8x16x64xf32>,
    return
  }
  func.func @transform_0(%arg0: i32, %arg1: i32) -> (i32, i32, i32, i32) {
    %c0_i32 = arith.constant 0 : i32
    %c0_i32_0 = arith.constant 0 : i32
    %c0_i32_1 = arith.constant 0 : i32
    return %arg0, %arg1, %c0_i32, %c0_i32_0 : i32, i32, i32, i32
  }
  func.func @transform_1(%arg0: i32, %arg1: i32) -> (i32, i32, i32, i32) {
    %c1_i32 = arith.constant 1 : i32
    %0 = arith.addi %arg1, %c1_i32 : i32
    %c8_i32 = arith.constant 8 : i32
    %1 = arith.muli %0, %c8_i32 : i32
    %c0_i32 = arith.constant 0 : i32
    %c0_i32_0 = arith.constant 0 : i32
    %c0_i32_1 = arith.constant 0 : i32
    return %arg0, %1, %c0_i32, %c0_i32_0 : i32, i32, i32, i32
  }
  func.func @transform_2(%arg0: i32, %arg1: i32) -> (i32, i32, i32, i32) {
    %c1_i32 = arith.constant 1 : i32
    %0 = arith.addi %arg1, %c1_i32 : i32
    %c8_i32 = arith.constant 8 : i32
    %1 = arith.muli %0, %c8_i32 : i32
    %c1_i32_0 = arith.constant 1 : i32
    %2 = arith.addi %1, %c1_i32_0 : i32
    %c0_i32 = arith.constant 0 : i32
    %c0_i32_1 = arith.constant 0 : i32
    %c0_i32_2 = arith.constant 0 : i32
    return %arg0, %2, %c0_i32, %c0_i32_1 : i32, i32, i32, i32
  }
  func.func @transform_3(%arg0: i32, %arg1: i32) -> (i32, i32, i32) {
    %c0_i32 = arith.constant 0 : i32
    %c0_i32_0 = arith.constant 0 : i32
    %c0_i32_1 = arith.constant 0 : i32
    %c0_i32_2 = arith.constant 0 : i32
    return %c0_i32, %c0_i32_0, %c0_i32_1 : i32, i32, i32
  }
  func.func @transform_4(%arg0: i32, %arg1: i32) -> (i32, i32, i32, i32) {
    %c0_i32 = arith.constant 0 : i32
    %c0_i32_0 = arith.constant 0 : i32
    %c0_i32_1 = arith.constant 0 : i32
    return %arg0, %arg1, %c0_i32, %c0_i32_0 : i32, i32, i32, i32
  }
}

</mosaic_0001>

<llo_original>
// kernel: tpu_custom_call.1
$region0: #{tpu_custom_call.1}
  #allocation0 [shape = 'u32[]', space=smem, size = 0x4, offset = 0x4, fixed_abs, tag = 'smem constant byte address 0x4 - core index']
  #allocation1 [shape = 'u32[144,128]{1,0:T(1,128)}', space=vmem, size = 0x12000, scoped, tag = 'internal scratch']
  %s0 = inlined_call_operand.vmem [shape: bf16[2,18,18,64], index: 0, kind: input, shape index: {}]
  %s1 = inlined_call_operand.vmem [shape: bf16[2,18,18,64], index: 1, kind: input, shape index: {}]
  %s2 = inlined_call_operand.vmem [shape: bf16[2,18,18,64], index: 2, kind: input, shape index: {}]
  %s3 = inlined_call_operand.vmem [shape: bf16[3,192,64], index: 3, kind: input, shape index: {}]
  %s4 = inlined_call_operand.hbm [shape: f32[2,16,16,64], index: 4, kind: output, shape index: {}]
  %s5 = sld [smem:[#allocation0]]
  $region49: #{tpu_custom_call.1} parent=0
    _
  %s7 = ssub.s32 1, %s5
  %s8 = scalar_select 0, %s7, %s5
  $region1: #{tpu_custom_call.1} parent=0
    #allocation2 [shape = 'u8[131072]{0}', space=vmem, size = 0x20000, scoped, tag = 'output window, operand 0']
    #allocation3 [shape = 's32[2]{0}', space=sflag, size = 0x8, scoped, tag = 'scoped memory for tpu_custom_call.1']
    %9 = vsyncpa [#allocation3], 0
    %s10 = scalar_lea.sflag [#allocation3], 1
    %11 = vsyncpa %s10, 0
    loop: start=0, step=1, limit=6
    $region2: #{tpu_custom_call.1} parent=1 // loop_pre_header
      _
    $region3: #{tpu_custom_call.1} parent=1 // loop_header
      %s13 = sphi 0, %s17
      %p14 = scmp.ge.s32.totalorder %s13, 6
      %s20 = sphi 0, %s32
      %s21 = sphi 0, %s28
      %s22 = sphi 0, %s20
      %s23 = sphi 0, %s21
      %s24 = sphi 0, %s22
      %s25 = sphi 0, %s23
      %s37 = sphi 0, %s39
      %s40 = sphi 0, %s37
      %s41 = sphi 0, %s40
      %s57 = sphi 0, %s41
      %s69 = sphi 0, %s71
      %s72 = sphi 0, %s69
      %s73 = sphi 0, %s72
      %s89 = sphi 0, %s73
      %s103 = sphi 0, %s105
      %s106 = sphi 0, %s103
      %s107 = sphi 0, %s106
      %s123 = sphi 0, %s107
      %s127 = sphi 0, %s127
      %s129 = sphi 0, %s127
      %s130 = sphi 0, %s129
      %s144 = sphi 0, %s130
      %s152 = sphi 0, %s154
      %s155 = sphi 0, %s152
      %s156 = sphi 0, %s155
      %s172 = sphi 0, %s156
    $region4: #{tpu_custom_call.1} parent=1 // loop_header_branch
      %16 = sbr.rel (%p14) target = $region8
    $region5: #{tpu_custom_call.1} parent=1 // loop_body
      %s18 = ssub.s32 %s13, 1
      %s19 = ssub.s32 %s13, 2
      %s26 = sadd.s32 1, %s21
      %p27 = scmp.ge.s32.totalorder %s26, 2
      %s28 = scalar_select %p27, 0, %s26
      %s29 = sadd.s32 1, %s20
      %s30 = scalar_select %p27, %s29, %s20
      %p31 = scmp.ge.s32.totalorder %s30, 2
      %s32 = scalar_select %p31, 0, %s30
      %s33 = ssub.s32 %s20, %s32
      %s34 = ssub.s32 %s21, %s28
      %s35 = sor.u32 %s33, %s34
      %p36 = scmp.eq.s32.totalorder %s35, 0
      %s38 = sadd.s32 %s37, 1
      %s39 = scalar_select %p36, %s37, %s38
      %p42 = pneg %p36
      %p43 = scmp.eq.s32.totalorder %s13, 3
      %p44 = por %p42, %p43
      %p45 = scmp.ne.s32.totalorder %s37, %s40
      %p46 = scmp.eq.s32.totalorder %s13, 0
      %p47 = por %p45, %p46
      %p48 = scmp.ne.s32.totalorder %s37, %s40
      %p49 = scmp.eq.s32.totalorder %s18, 3
      %p50 = por %p48, %p49
      %p51 = scmp.ne.s32.totalorder %s40, %s41
      %p52 = scmp.eq.s32.totalorder %s18, 0
      %p53 = por %p51, %p52
      %p54 = scmp.ne.s32.totalorder %s40, %s41
      %p55 = scmp.eq.s32.totalorder %s19, 3
      %p56 = por %p54, %p55
      %p58 = scmp.ne.s32.totalorder %s41, %s57
      %p59 = scmp.eq.s32.totalorder %s19, 0
      %p60 = por %p58, %p59
      %s61 = sadd.s32 %s21, 1
      %s62 = smul.u32 %s61, 8
      %s63 = sadd.s32 %s28, 1
      %s64 = smul.u32 %s63, 8
      %s65 = ssub.s32 %s20, %s32
      %s66 = ssub.s32 %s62, %s64
      %s67 = sor.u32 %s65, %s66
      %p68 = scmp.eq.s32.totalorder %s67, 0
      %s70 = sadd.s32 %s69, 1
      %s71 = scalar_select %p68, %s69, %s70
      %p74 = pneg %p68
      %p75 = scmp.eq.s32.totalorder %s13, 3
      %p76 = por %p74, %p75
      %p77 = scmp.ne.s32.totalorder %s69, %s72
      %p78 = scmp.eq.s32.totalorder %s13, 0
      %p79 = por %p77, %p78
      %p80 = scmp.ne.s32.totalorder %s69, %s72
      %p81 = scmp.eq.s32.totalorder %s18, 3
      %p82 = por %p80, %p81
      %p83 = scmp.ne.s32.totalorder %s72, %s73
      %p84 = scmp.eq.s32.totalorder %s18, 0
      %p85 = por %p83, %p84
      %p86 = scmp.ne.s32.totalorder %s72, %s73
      %p87 = scmp.eq.s32.totalorder %s19, 3
      %p88 = por %p86, %p87
      %p90 = scmp.ne.s32.totalorder %s73, %s89
      %p91 = scmp.eq.s32.totalorder %s19, 0
      %p92 = por %p90, %p91
      %s93 = sadd.s32 %s21, 1
      %s94 = smul.u32 %s93, 8
      %s95 = sadd.s32 %s94, 1
      %s96 = sadd.s32 %s28, 1
      %s97 = smul.u32 %s96, 8
      %s98 = sadd.s32 %s97, 1
      %s99 = ssub.s32 %s20, %s32
      %s100 = ssub.s32 %s95, %s98
      %s101 = sor.u32 %s99, %s100
      %p102 = scmp.eq.s32.totalorder %s101, 0
      %s104 = sadd.s32 %s103, 1
      %s105 = scalar_select %p102, %s103, %s104
      %p108 = pneg %p102
      %p109 = scmp.eq.s32.totalorder %s13, 3
      %p110 = por %p108, %p109
      %p111 = scmp.ne.s32.totalorder %s103, %s106
      %p112 = scmp.eq.s32.totalorder %s13, 0
      %p113 = por %p111, %p112
      %p114 = scmp.ne.s32.totalorder %s103, %s106
      %p115 = scmp.eq.s32.totalorder %s18, 3
      %p116 = por %p114, %p115
      %p117 = scmp.ne.s32.totalorder %s106, %s107
      %p118 = scmp.eq.s32.totalorder %s18, 0
      %p119 = por %p117, %p118
      %p120 = scmp.ne.s32.totalorder %s106, %s107
      %p121 = scmp.eq.s32.totalorder %s19, 3
      %p122 = por %p120, %p121
      %p124 = scmp.ne.s32.totalorder %s107, %s123
      %p125 = scmp.eq.s32.totalorder %s19, 0
      %p126 = por %p124, %p125
      %s128 = sadd.s32 %s127, 1
      %p131 = scmp.eq.s32.totalorder %s13, 3
      %p132 = scmp.ne.s32.totalorder %s127, %s129
      %p133 = scmp.eq.s32.totalorder %s13, 0
      %p134 = por %p132, %p133
      %p135 = scmp.ne.s32.totalorder %s127, %s129
      %p136 = scmp.eq.s32.totalorder %s18, 3
      %p137 = por %p135, %p136
      %p138 = scmp.ne.s32.totalorder %s129, %s130
      %p139 = scmp.eq.s32.totalorder %s18, 0
      %p140 = por %p138, %p139
      %p141 = scmp.ne.s32.totalorder %s129, %s130
      %p142 = scmp.eq.s32.totalorder %s19, 3
      %p143 = por %p141, %p142
      %p145 = scmp.ne.s32.totalorder %s130, %s144
      %p146 = scmp.eq.s32.totalorder %s19, 0
      %p147 = por %p145, %p146
      %s148 = ssub.s32 %s20, %s32
      %s149 = ssub.s32 %s21, %s28
      %s150 = sor.u32 %s148, %s149
      %p151 = scmp.eq.s32.totalorder %s150, 0
      %s153 = sadd.s32 %s152, 1
      %s154 = scalar_select %p151, %s152, %s153
      %p157 = pneg %p151
      %p158 = scmp.eq.s32.totalorder %s13, 3
      %p159 = por %p157, %p158
      %p160 = scmp.ne.s32.totalorder %s152, %s155
      %p161 = scmp.eq.s32.totalorder %s13, 0
      %p162 = por %p160, %p161
      %p163 = scmp.ne.s32.totalorder %s152, %s155
      %p164 = scmp.eq.s32.totalorder %s18, 3
      %p165 = por %p163, %p164
      %p166 = scmp.ne.s32.totalorder %s155, %s156
      %p167 = scmp.eq.s32.totalorder %s18, 0
      %p168 = por %p166, %p167
      %p169 = scmp.ne.s32.totalorder %s155, %s156
      %p170 = scmp.eq.s32.totalorder %s19, 3
      %p171 = por %p169, %p170
      %p173 = scmp.ne.s32.totalorder %s156, %s172
      %p174 = scmp.eq.s32.totalorder %s19, 0
      %p175 = por %p173, %p174
      %p176 = scmp.le.s32.totalorder 1, %s13
      %p177 = scmp.lt.s32.totalorder %s13, 5
      %p178 = pnand %p176, %p177
      %p179 = pneg %p178
      // Predicated region
      $region9: #{tpu_custom_call.1} parent=5 // pred_check
        _
      $region10: #{tpu_custom_call.1} parent=5 // pred_check_branch
        %181 = sbr.rel (%p178) target = $region12
      $region11: #{tpu_custom_call.1} parent=5 // pred_region
        %s182 = ssub.s32 %s13, 1
        // Predicated region
        $region13: #{tpu_custom_call.1} parent=11 // pred_check
          %p183 = pneg %p140
        $region14: #{tpu_custom_call.1} parent=11 // pred_check_branch
          %185 = sbr.rel (%p183) target = $region16
        $region15: #{tpu_custom_call.1} parent=11 // pred_region
          _
        $region16: #{tpu_custom_call.1} parent=11 // pred_fallthru
          _
      $region12: #{tpu_custom_call.1} parent=5 // pred_fallthru
        _
      %p186 = scmp.lt.s32.totalorder %s13, 4
      // Predicated region
      $region17: #{tpu_custom_call.1} parent=5 // pred_check
        %p187 = pneg %p186
      $region18: #{tpu_custom_call.1} parent=5 // pred_check_branch
        %189 = sbr.rel (%p187) target = $region20
      $region19: #{tpu_custom_call.1} parent=5 // pred_region
        // Predicated region
        $region21: #{tpu_custom_call.1} parent=19 // pred_check
          %p190 = pneg %p47
        $region22: #{tpu_custom_call.1} parent=19 // pred_check_branch
          %192 = sbr.rel (%p190) target = $region24
        $region23: #{tpu_custom_call.1} parent=19 // pred_region
          %s193 = smul.u32 8, %s21
          %s194 = ssub.s32 18, %s193
          %p195 = scmp.lt.s32.totalorder %s194, 8
          %s196 = scalar_select %p195, %s194, 8
          %s197 = smul.u32 64, %s196
          %s198 = smul.u32 %s197, 3
          %p199 = scmp.lt.s32.totalorder %s20, 1
          %s200 = scalar_select %p199, %s20, 1
          %p201 = scmp.lt.s32.totalorder %s193, 17
          %s202 = scalar_select %p201, %s193, 17
          %s203 = smul.addr %s202, 3
          %s204 = smul.addr %s200, 54
          %s205 = sadd.s32 %s203, %s204
          %s206 = smul.addr %s205, 4
          %s207 = scalar_lea.vmem %s0, %s206
          %s208 = smul.u32 8, %s21
          %s209 = ssub.s32 18, %s208
          %p210 = scmp.lt.s32.totalorder %s209, 8
          %s211 = scalar_select %p210, %s209, 8
          %s212 = smul.u32 64, %s211
          %s213 = smul.u32 %s212, 3
        $region24: #{tpu_custom_call.1} parent=19 // pred_fallthru
          _
        // Predicated region
        $region25: #{tpu_custom_call.1} parent=19 // pred_check
          %p214 = pneg %p79
        $region26: #{tpu_custom_call.1} parent=19 // pred_check_branch
          %216 = sbr.rel (%p214) target = $region28
        $region27: #{tpu_custom_call.1} parent=19 // pred_region
          %s217 = sadd.s32 %s21, 1
          %s218 = smul.u32 %s217, 8
          %p219 = scmp.lt.s32.totalorder %s20, 1
          %s220 = scalar_select %p219, %s20, 1
          %p221 = scmp.lt.s32.totalorder %s218, 17
          %s222 = scalar_select %p221, %s218, 17
          %s223 = smul.addr %s222, 3
          %s224 = smul.addr %s220, 54
          %s225 = sadd.s32 %s223, %s224
          %s226 = smul.addr %s225, 4
          %s227 = scalar_lea.vmem %s1, %s226
          %s228 = sadd.s32 %s21, 1
          %s229 = smul.u32 %s228, 8
        $region28: #{tpu_custom_call.1} parent=19 // pred_fallthru
          _
        // Predicated region
        $region29: #{tpu_custom_call.1} parent=19 // pred_check
          %p230 = pneg %p113
        $region30: #{tpu_custom_call.1} parent=19 // pred_check_branch
          %232 = sbr.rel (%p230) target = $region32
        $region31: #{tpu_custom_call.1} parent=19 // pred_region
          %s233 = sadd.s32 %s21, 1
          %s234 = smul.u32 %s233, 8
          %s235 = sadd.s32 %s234, 1
          %p236 = scmp.lt.s32.totalorder %s20, 1
          %s237 = scalar_select %p236, %s20, 1
          %p238 = scmp.lt.s32.totalorder %s235, 17
          %s239 = scalar_select %p238, %s235, 17
          %s240 = smul.addr %s239, 3
          %s241 = smul.addr %s237, 54
          %s242 = sadd.s32 %s240, %s241
          %s243 = smul.addr %s242, 4
          %s244 = scalar_lea.vmem %s2, %s243
          %s245 = sadd.s32 %s21, 1
          %s246 = smul.u32 %s245, 8
          %s247 = sadd.s32 %s246, 1
        $region32: #{tpu_custom_call.1} parent=19 // pred_fallthru
          _
      $region20: #{tpu_custom_call.1} parent=5 // pred_fallthru
        _
      %p248 = scmp.le.s32.totalorder 1, %s13
      %p249 = scmp.lt.s32.totalorder %s13, 5
      %p250 = pnand %p248, %p249
      %p251 = pneg %p250
      // Predicated region
      $region33: #{tpu_custom_call.1} parent=5 // pred_check
        _
      $region34: #{tpu_custom_call.1} parent=5 // pred_check_branch
        %253 = sbr.rel (%p250) target = $region36
      $region35: #{tpu_custom_call.1} parent=5 // pred_region
        %s254 = ssub.s32 %s13, 1
        %s255 = smul.u32 8, %s23
        %s256 = ssub.s32 18, %s255
        %p257 = scmp.lt.s32.totalorder %s256, 8
        %s258 = scalar_select %p257, %s256, 8
        %s259 = smul.u32 64, %s258
        %s260 = smul.u32 %s259, 3
        %p261 = scmp.lt.s32.totalorder %s22, 1
        %s262 = scalar_select %p261, %s22, 1
        %p263 = scmp.lt.s32.totalorder %s255, 17
        %s264 = scalar_select %p263, %s255, 17
        %s265 = smul.addr %s264, 3
        %s266 = smul.addr %s262, 54
        %s267 = sadd.s32 %s265, %s266
        %s268 = smul.addr %s267, 4
        %s269 = scalar_lea.vmem %s0, %s268
        %p270 = pneg %p53
        %p271 = pneg %p50
        %s272 = sadd.s32 %s23, 1
        %s273 = smul.u32 %s272, 8
        %p274 = scmp.lt.s32.totalorder %s22, 1
        %s275 = scalar_select %p274, %s22, 1
        %p276 = scmp.lt.s32.totalorder %s273, 17
        %s277 = scalar_select %p276, %s273, 17
        %s278 = smul.addr %s277, 3
        %s279 = smul.addr %s275, 54
        %s280 = sadd.s32 %s278, %s279
        %s281 = smul.addr %s280, 4
        %s282 = scalar_lea.vmem %s1, %s281
        %p283 = pneg %p85
        %p284 = pneg %p82
        %s285 = sadd.s32 %s23, 1
        %s286 = smul.u32 %s285, 8
        %s287 = sadd.s32 %s286, 1
        %p288 = scmp.lt.s32.totalorder %s22, 1
        %s289 = scalar_select %p288, %s22, 1
        %p290 = scmp.lt.s32.totalorder %s287, 17
        %s291 = scalar_select %p290, %s287, 17
        %s292 = smul.addr %s291, 3
        %s293 = smul.addr %s289, 54
        %s294 = sadd.s32 %s292, %s293
        %s295 = smul.addr %s294, 4
        %s296 = scalar_lea.vmem %s2, %s295
        %p297 = pneg %p119
        %p298 = pneg %p116
        %p299 = pneg %p140
        %p300 = pneg %p137
        %p301 = pneg %p168
        %p302 = pneg %p165
        %s303 = sand.u32 %s155, 1
        %s304 = scalar_lea.sflag [#allocation3], %s303
        %s305 = sand.u32 %s155, 1
        %s306 = smul.addr %s305, 128
        %s307 = scalar_lea.vmem [#allocation2], %s306
        %s308 = smul.u32 8, %s23
        %s309 = ssub.s32 18, %s308
        %p310 = scmp.lt.s32.totalorder %s309, 8
        %s311 = scalar_select %p310, %s309, 8
        %s312 = smul.u32 64, %s311
        %s313 = smul.u32 %s312, 3
        %p314 = scmp.lt.s32.totalorder %s22, 1
        %s315 = scalar_select %p314, %s22, 1
        %p316 = scmp.lt.s32.totalorder %s308, 17
        %s317 = scalar_select %p316, %s308, 17
        %s318 = smul.addr %s317, 3
        %s319 = smul.addr %s315, 54
        %s320 = sadd.s32 %s318, %s319
        %s321 = smul.addr %s320, 4
        %s322 = scalar_lea.vmem %s0, %s321
        %s323 = smul.u32 8, %s23
        %s324 = ssub.s32 18, %s323
        %p325 = scmp.lt.s32.totalorder %s324, 8
        %s326 = scalar_select %p325, %s324, 8
        %s327 = smul.u32 64, %s326
        %s328 = smul.u32 %s327, 3
        %s329 = sadd.s32 %s23, 1
        %s330 = smul.u32 %s329, 8
        %p331 = scmp.lt.s32.totalorder %s22, 1
        %s332 = scalar_select %p331, %s22, 1
        %p333 = scmp.lt.s32.totalorder %s330, 17
        %s334 = scalar_select %p333, %s330, 17
        %s335 = smul.addr %s334, 3
        %s336 = smul.addr %s332, 54
        %s337 = sadd.s32 %s335, %s336
        %s338 = smul.addr %s337, 4
        %s339 = scalar_lea.vmem %s1, %s338
        %s340 = sadd.s32 %s23, 1
        %s341 = smul.u32 %s340, 8
        %s342 = sadd.s32 %s23, 1
        %s343 = smul.u32 %s342, 8
        %s344 = sadd.s32 %s343, 1
        %p345 = scmp.lt.s32.totalorder %s22, 1
        %s346 = scalar_select %p345, %s22, 1
        %p347 = scmp.lt.s32.totalorder %s344, 17
        %s348 = scalar_select %p347, %s344, 17
        %s349 = smul.addr %s348, 3
        %s350 = smul.addr %s346, 54
        %s351 = sadd.s32 %s349, %s350
        %s352 = smul.addr %s351, 4
        %s353 = scalar_lea.vmem %s2, %s352
        %s354 = sadd.s32 %s23, 1
        %s355 = smul.u32 %s354, 8
        %s356 = sadd.s32 %s355, 1
        %s357 = smul.u32 8, %s23
        %v359 = vld [vmem:[%s322] sm:$0xf]
        %v360 = vld [vmem:[%s322 + $0x4] sm:$0xf]
        %v361 = vld [vmem:[%s322 + $0x8] sm:$0x1]
        %v362 = vld [vmem:[%s322 + $0xc] sm:$0xf]
        %v363 = vld [vmem:[%s322 + $0x10] sm:$0xf]
        %v364 = vld [vmem:[%s322 + $0x14] sm:$0x1]
        %v365 = vld [vmem:[%s322 + $0x18] sm:$0xf]
        %v366 = vld [vmem:[%s322 + $0x1c] sm:$0xf]
        %v367 = vld [vmem:[%s322 + $0x20] sm:$0x1]
        %v368 = vld [vmem:[%s322 + $0x24] sm:$0xf]
        %v369 = vld [vmem:[%s322 + $0x28] sm:$0xf]
        %v370 = vld [vmem:[%s322 + $0x2c] sm:$0x1]
        %v371 = vld [vmem:[%s322 + $0x30] sm:$0xf]
        %v372 = vld [vmem:[%s322 + $0x34] sm:$0xf]
        %v373 = vld [vmem:[%s322 + $0x38] sm:$0x1]
        %v374 = vld [vmem:[%s322 + $0x3c] sm:$0xf]
        %v375 = vld [vmem:[%s322 + $0x40] sm:$0xf]
        %v376 = vld [vmem:[%s322 + $0x44] sm:$0x1]
        %v377 = vld [vmem:[%s322 + $0x48] sm:$0xf]
        %v378 = vld [vmem:[%s322 + $0x4c] sm:$0xf]
        %v379 = vld [vmem:[%s322 + $0x50] sm:$0x1]
        %v380 = vld [vmem:[%s322 + $0x54] sm:$0xf]
        %v381 = vld [vmem:[%s322 + $0x58] sm:$0xf]
        %v382 = vld [vmem:[%s322 + $0x5c] sm:$0x1]
        %v383 = vld [vmem:[%s339] sm:$0xf]
        %v384 = vld [vmem:[%s339 + $0x4] sm:$0xf]
        %v385 = vld [vmem:[%s339 + $0x8] sm:$0x1]
        %v386 = vld [vmem:[%s353] sm:$0xf]
        %v387 = vld [vmem:[%s353 + $0x4] sm:$0xf]
        %v388 = vld [vmem:[%s353 + $0x8] sm:$0x1]
        %v409 = vunpack.c.l.b16 %v359
        %v410 = vunpack.c.l.b16 %v360
        %v411 = vunpack.c.l.b16 %v362
        %v412 = vunpack.c.l.b16 %v363
        %v413 = vunpack.c.l.b16 %v365
        %v414 = vunpack.c.l.b16 %v366
        %v415 = vunpack.c.l.b16 %v368
        %v416 = vunpack.c.l.b16 %v369
        %v417 = vunpack.c.l.b16 %v371
        %v418 = vunpack.c.l.b16 %v372
        %v419 = vunpack.c.l.b16 %v374
        %v420 = vunpack.c.l.b16 %v375
        %v421 = vunpack.c.l.b16 %v377
        %v422 = vunpack.c.l.b16 %v378
        %v423 = vunpack.c.l.b16 %v380
        %v424 = vunpack.c.l.b16 %v381
        %v425 = vunpack.c.l.b16 %v383
        %v426 = vunpack.c.l.b16 %v384
        %v427 = vunpack.c.l.b16 %v386
        %v428 = vunpack.c.l.b16 %v387
        %v429 = vpack.c.b16 %v410, %v409
        %v430 = vpack.c.b16 %v412, %v411
        %v431 = vpack.c.b16 %v414, %v413
        %v432 = vpack.c.b16 %v416, %v415
        %v433 = vpack.c.b16 %v418, %v417
        %v434 = vpack.c.b16 %v420, %v419
        %v435 = vpack.c.b16 %v422, %v421
        %v436 = vpack.c.b16 %v424, %v423
        %v437 = vpack.c.b16 %v426, %v425
        %v438 = vpack.c.b16 %v428, %v427
        %v449 = vunpack.c.l.b16 %v361
        %v450 = vunpack.c.l.b16 %v364
        %v451 = vunpack.c.l.b16 %v367
        %v452 = vunpack.c.l.b16 %v370
        %v453 = vunpack.c.l.b16 %v373
        %v454 = vunpack.c.l.b16 %v376
        %v455 = vunpack.c.l.b16 %v379
        %v456 = vunpack.c.l.b16 %v382
        %v457 = vunpack.c.l.b16 %v385
        %v458 = vunpack.c.l.b16 %v388
        %v459 = vpack.c.b16 %v449, %v449
        %v460 = vpack.c.b16 %v450, %v450
        %v461 = vpack.c.b16 %v451, %v451
        %v462 = vpack.c.b16 %v452, %v452
        %v463 = vpack.c.b16 %v453, %v453
        %v464 = vpack.c.b16 %v454, %v454
        %v465 = vpack.c.b16 %v455, %v455
        %v466 = vpack.c.b16 %v456, %v456
        %v467 = vpack.c.b16 %v457, %v457
        %v468 = vpack.c.b16 %v458, %v458
        %vm469 = vsmask.f32 7424
        %v471 = vshrl.u32 %v429, 16
        %v473 = vshll.u32 %v429, 16
        %v475 = vrot.slane %v473, 1
        %v476 = vor.u32 %v471, %v475
        %v478 = vshll.u32 %v459, 16
        %v480 = vrot.slane %v478, 1
        %v481 = vsel %vm469, %v476, %v480
        %v483 = vshrl.u32 %v430, 16
        %v485 = vshll.u32 %v430, 16
        %v487 = vrot.slane %v485, 1
        %v488 = vor.u32 %v483, %v487
        %v490 = vshll.u32 %v460, 16
        %v492 = vrot.slane %v490, 1
        %v493 = vsel %vm469, %v488, %v492
        %v495 = vshrl.u32 %v431, 16
        %v497 = vshll.u32 %v431, 16
        %v499 = vrot.slane %v497, 1
        %v500 = vor.u32 %v495, %v499
        %v502 = vshll.u32 %v461, 16
        %v504 = vrot.slane %v502, 1
        %v505 = vsel %vm469, %v500, %v504
        %v507 = vshrl.u32 %v432, 16
        %v509 = vshll.u32 %v432, 16
        %v511 = vrot.slane %v509, 1
        %v512 = vor.u32 %v507, %v511
        %v514 = vshll.u32 %v462, 16
        %v516 = vrot.slane %v514, 1
        %v517 = vsel %vm469, %v512, %v516
        %v519 = vshrl.u32 %v433, 16
        %v521 = vshll.u32 %v433, 16
        %v523 = vrot.slane %v521, 1
        %v524 = vor.u32 %v519, %v523
        %v526 = vshll.u32 %v463, 16
        %v528 = vrot.slane %v526, 1
        %v529 = vsel %vm469, %v524, %v528
        %v531 = vshrl.u32 %v434, 16
        %v533 = vshll.u32 %v434, 16
        %v535 = vrot.slane %v533, 1
        %v536 = vor.u32 %v531, %v535
        %v538 = vshll.u32 %v464, 16
        %v540 = vrot.slane %v538, 1
        %v541 = vsel %vm469, %v536, %v540
        %v543 = vshrl.u32 %v435, 16
        %v545 = vshll.u32 %v435, 16
        %v547 = vrot.slane %v545, 1
        %v548 = vor.u32 %v543, %v547
        %v550 = vshll.u32 %v465, 16
        %v552 = vrot.slane %v550, 1
        %v553 = vsel %vm469, %v548, %v552
        %v555 = vshrl.u32 %v436, 16
        %v557 = vshll.u32 %v436, 16
        %v559 = vrot.slane %v557, 1
        %v560 = vor.u32 %v555, %v559
        %v562 = vshll.u32 %v466, 16
        %v564 = vrot.slane %v562, 1
        %v565 = vsel %vm469, %v560, %v564
        %v567 = vshrl.u32 %v437, 16
        %v569 = vshll.u32 %v437, 16
        %v571 = vrot.slane %v569, 1
        %v572 = vor.u32 %v567, %v571
        %v574 = vshll.u32 %v467, 16
        %v576 = vrot.slane %v574, 1
        %v577 = vsel %vm469, %v572, %v576
        %v579 = vshrl.u32 %v438, 16
        %v581 = vshll.u32 %v438, 16
        %v583 = vrot.slane %v581, 1
        %v584 = vor.u32 %v579, %v583
        %v586 = vshll.u32 %v468, 16
        %v588 = vrot.slane %v586, 1
        %v589 = vsel %vm469, %v584, %v588
        %590 = vrot.lane.b32.xlu0 %v481, 64
        %v591 = vpop.permute.xlu0 %590
        %592 = vrot.lane.b32.xlu0 %v493, 64
        %v593 = vpop.permute.xlu0 %592
        %594 = vrot.lane.b32.xlu0 %v505, 64
        %v595 = vpop.permute.xlu0 %594
        %596 = vrot.lane.b32.xlu0 %v517, 64
        %v597 = vpop.permute.xlu0 %596
        %598 = vrot.lane.b32.xlu0 %v529, 64
        %v599 = vpop.permute.xlu0 %598
        %600 = vrot.lane.b32.xlu0 %v541, 64
        %v601 = vpop.permute.xlu0 %600
        %602 = vrot.lane.b32.xlu0 %v553, 64
        %v603 = vpop.permute.xlu0 %602
        %604 = vrot.lane.b32.xlu0 %v565, 64
        %v605 = vpop.permute.xlu0 %604
        %606 = vrot.lane.b32.xlu0 %v577, 64
        %v607 = vpop.permute.xlu0 %606
        %608 = vrot.lane.b32.xlu0 %v589, 64
        %v609 = vpop.permute.xlu0 %608
        %vm610 = vcmask 1046528
        %v611 = vrot.slane %v429, 1
        %v612 = vrot.slane %v459, 1
        %v613 = vsel %vm610, %v611, %v612
        %v614 = vrot.slane %v430, 1
        %v615 = vrot.slane %v460, 1
        %v616 = vsel %vm610, %v614, %v615
        %v617 = vrot.slane %v431, 1
        %v618 = vrot.slane %v461, 1
        %v619 = vsel %vm610, %v617, %v618
        %v620 = vrot.slane %v432, 1
        %v621 = vrot.slane %v462, 1
        %v622 = vsel %vm610, %v620, %v621
        %v623 = vrot.slane %v433, 1
        %v624 = vrot.slane %v463, 1
        %v625 = vsel %vm610, %v623, %v624
        %v626 = vrot.slane %v434, 1
        %v627 = vrot.slane %v464, 1
        %v628 = vsel %vm610, %v626, %v627
        %v629 = vrot.slane %v435, 1
        %v630 = vrot.slane %v465, 1
        %v631 = vsel %vm610, %v629, %v630
        %v632 = vrot.slane %v436, 1
        %v633 = vrot.slane %v466, 1
        %v634 = vsel %vm610, %v632, %v633
        %v635 = vrot.slane %v437, 1
        %v636 = vrot.slane %v467, 1
        %v637 = vsel %vm610, %v635, %v636
        %v638 = vrot.slane %v438, 1
        %v639 = vrot.slane %v468, 1
        %v640 = vsel %vm610, %v638, %v639
        %vm641 = vcmask 523264
        %v643 = vsel %vm641, %v429, %v591
        %v646 = vsel %vm641, %v430, %v593
        %v649 = vsel %vm641, %v431, %v595
        %v652 = vsel %vm641, %v432, %v597
        %v655 = vsel %vm641, %v433, %v599
        %v658 = vsel %vm641, %v434, %v601
        %v661 = vsel %vm641, %v435, %v603
        %v664 = vsel %vm641, %v436, %v605
        %v667 = vsel %vm641, %v437, %v607
        %v670 = vsel %vm641, %v438, %v609
        %v672 = vld [vmem:[%s3] sm:$0xf]
        %v673 = vld [vmem:[%s3 + $0x4] sm:$0xf]
        %v674 = vld [vmem:[%s3 + $0x8] sm:$0xf]
        %v675 = vld [vmem:[%s3 + $0xc] sm:$0xf]
        %v676 = vld [vmem:[%s3 + $0x10] sm:$0xf]
        %v677 = vld [vmem:[%s3 + $0x14] sm:$0xf]
        %v678 = vld [vmem:[%s3 + $0x18] sm:$0xf]
        %v679 = vld [vmem:[%s3 + $0x1c] sm:$0xf]
        %v680 = vld [vmem:[%s3 + $0x20] sm:$0xf]
        %v681 = vld [vmem:[%s3 + $0x24] sm:$0xf]
        %v682 = vld [vmem:[%s3 + $0x28] sm:$0xf]
        %v683 = vld [vmem:[%s3 + $0x2c] sm:$0xf]
        %v684 = vld [vmem:[%s3 + $0x30] sm:$0xf]
        %v685 = vld [vmem:[%s3 + $0x34] sm:$0xf]
        %v686 = vld [vmem:[%s3 + $0x38] sm:$0xf]
        %v687 = vld [vmem:[%s3 + $0x3c] sm:$0xf]
        %v688 = vld [vmem:[%s3 + $0x40] sm:$0xf]
        %v689 = vld [vmem:[%s3 + $0x44] sm:$0xf]
        %v690 = vld [vmem:[%s3 + $0x48] sm:$0xf]
        %v691 = vld [vmem:[%s3 + $0x4c] sm:$0xf]
        %v692 = vld [vmem:[%s3 + $0x50] sm:$0xf]
        %v693 = vld [vmem:[%s3 + $0x54] sm:$0xf]
        %v694 = vld [vmem:[%s3 + $0x58] sm:$0xf]
        %v695 = vld [vmem:[%s3 + $0x5c] sm:$0xf]
        %s696 = scalar_lea.vmem %s3, 96
        %v697 = vld [vmem:[%s696] sm:$0xf]
        %v698 = vld [vmem:[%s696 + $0x4] sm:$0xf]
        %v699 = vld [vmem:[%s696 + $0x8] sm:$0xf]
        %v700 = vld [vmem:[%s696 + $0xc] sm:$0xf]
        %v701 = vld [vmem:[%s696 + $0x10] sm:$0xf]
        %v702 = vld [vmem:[%s696 + $0x14] sm:$0xf]
        %v703 = vld [vmem:[%s696 + $0x18] sm:$0xf]
        %v704 = vld [vmem:[%s696 + $0x1c] sm:$0xf]
        %v705 = vld [vmem:[%s696 + $0x20] sm:$0xf]
        %v706 = vld [vmem:[%s696 + $0x24] sm:$0xf]
        %v707 = vld [vmem:[%s696 + $0x28] sm:$0xf]
        %v708 = vld [vmem:[%s696 + $0x2c] sm:$0xf]
        %v709 = vld [vmem:[%s696 + $0x30] sm:$0xf]
        %v710 = vld [vmem:[%s696 + $0x34] sm:$0xf]
        %v711 = vld [vmem:[%s696 + $0x38] sm:$0xf]
        %v712 = vld [vmem:[%s696 + $0x3c] sm:$0xf]
        %v713 = vld [vmem:[%s696 + $0x40] sm:$0xf]
        %v714 = vld [vmem:[%s696 + $0x44] sm:$0xf]
        %v715 = vld [vmem:[%s696 + $0x48] sm:$0xf]
        %v716 = vld [vmem:[%s696 + $0x4c] sm:$0xf]
        %v717 = vld [vmem:[%s696 + $0x50] sm:$0xf]
        %v718 = vld [vmem:[%s696 + $0x54] sm:$0xf]
        %v719 = vld [vmem:[%s696 + $0x58] sm:$0xf]
        %v720 = vld [vmem:[%s696 + $0x5c] sm:$0xf]
        %v745 = vunpack.c.l.b16 %v697
        %v746 = vunpack.c.l.b16 %v698
        %v747 = vunpack.c.l.b16 %v699
        %v748 = vunpack.c.l.b16 %v700
        %v749 = vunpack.c.l.b16 %v701
        %v750 = vunpack.c.l.b16 %v702
        %v751 = vunpack.c.l.b16 %v703
        %v752 = vunpack.c.l.b16 %v704
        %v753 = vunpack.c.l.b16 %v705
        %v754 = vunpack.c.l.b16 %v706
        %v755 = vunpack.c.l.b16 %v707
        %v756 = vunpack.c.l.b16 %v708
        %v757 = vunpack.c.l.b16 %v709
        %v758 = vunpack.c.l.b16 %v710
        %v759 = vunpack.c.l.b16 %v711
        %v760 = vunpack.c.l.b16 %v712
        %v761 = vunpack.c.l.b16 %v713
        %v762 = vunpack.c.l.b16 %v714
        %v763 = vunpack.c.l.b16 %v715
        %v764 = vunpack.c.l.b16 %v716
        %v765 = vunpack.c.l.b16 %v717
        %v766 = vunpack.c.l.b16 %v718
        %v767 = vunpack.c.l.b16 %v719
        %v768 = vunpack.c.l.b16 %v720
        %v769 = vpack.c.b16 %v746, %v745
        %v770 = vpack.c.b16 %v748, %v747
        %v771 = vpack.c.b16 %v750, %v749
        %v772 = vpack.c.b16 %v752, %v751
        %v773 = vpack.c.b16 %v754, %v753
        %v774 = vpack.c.b16 %v756, %v755
        %v775 = vpack.c.b16 %v758, %v757
        %v776 = vpack.c.b16 %v760, %v759
        %v777 = vpack.c.b16 %v762, %v761
        %v778 = vpack.c.b16 %v764, %v763
        %v779 = vpack.c.b16 %v766, %v765
        %v780 = vpack.c.b16 %v768, %v767
        %v794 = vsel %vm641, %v616, 0
        %v797 = vsel %vm641, %v619, 0
        %v800 = vsel %vm641, %v622, 0
        %v803 = vsel %vm641, %v625, 0
        %v806 = vsel %vm641, %v628, 0
        %v809 = vsel %vm641, %v631, 0
        %v812 = vsel %vm641, %v634, 0
        %v815 = vsel %vm641, %v637, 0
        %817 = vmatprep.subr.bf16.mxu0 0
        %818 = vmatpush1.bf16.msra.mxu0 %v776
        %819 = vmatprep.subr.bf16.mxu0 0
        %820 = vmatpush1.bf16.msra.mxu0 %v775
        %821 = vmatprep.subr.bf16.mxu0 0
        %822 = vmatpush1.bf16.msra.mxu0 %v774
        %823 = vmatprep.subr.bf16.mxu0 0
        %824 = vmatpush1.bf16.msra.mxu0 %v773
        %825 = vmatprep.subr.bf16.mxu0 0
        %826 = vmatpush1.bf16.msra.mxu0 %v772
        %827 = vmatprep.subr.bf16.mxu0 0
        %828 = vmatpush1.bf16.msra.mxu0 %v771
        %829 = vmatprep.subr.bf16.mxu0 0
        %830 = vmatpush1.bf16.msra.mxu0 %v770
        %831 = vmatprep.subr.bf16.mxu0 0
        %832 = vmatpush1.bf16.msra.mxu0 %v769
        %833 = vmatprep.subr.bf16.mxu0 0
        %834 = vmatpush2.bf16.msra.mxu0 0
        %835 = vmatprep.subr.bf16.mxu0 0
        %836 = vmatpush2.bf16.msra.mxu0 0
        %837 = vmatprep.subr.bf16.mxu0 0
        %838 = vmatpush2.bf16.msra.mxu0 0
        %839 = vmatprep.subr.bf16.mxu0 0
        %840 = vmatpush2.bf16.msra.mxu0 0
        %841 = vmatprep.subr.bf16.mxu0 0
        %842 = vmatpush2.bf16.msra.mxu0 %v780
        %843 = vmatprep.subr.bf16.mxu0 0
        %844 = vmatpush2.bf16.msra.mxu0 %v779
        %845 = vmatprep.subr.bf16.mxu0 0
        %846 = vmatpush2.bf16.msra.mxu0 %v778
        %847 = vmatprep.subr.bf16.mxu0 0
        %848 = vmatpush2.bf16.msra.mxu0 %v777
        %849 = vmatprep.mubr.bf16.mxu0 %v794
        %850 = vmatmul.mubr.bf16.gmra.mxu0 %v646
        %v851 = vpop.f32.mrf.mxu0
        %v852 = vadd.f32 0.0, %v851
        %v853 = vpop.f32.mrf.mxu0
        %v854 = vpop.f32.mrf.mxu0
        %v855 = vadd.f32 0.0, %v854
        %v856 = vpop.f32.mrf.mxu0
        %857 = vmatprep.mubr.bf16.mxu0 %v797
        %858 = vmatmul.mubr.bf16.gmra.mxu0 %v649
        %v859 = vpop.f32.mrf.mxu0
        %v860 = vadd.f32 0.0, %v859
        %v861 = vpop.f32.mrf.mxu0
        %v862 = vpop.f32.mrf.mxu0
        %v863 = vadd.f32 0.0, %v862
        %v864 = vpop.f32.mrf.mxu0
        %865 = vmatprep.mubr.bf16.mxu0 %v800
        %866 = vmatmul.mubr.bf16.gmra.mxu0 %v652
        %v867 = vpop.f32.mrf.mxu0
        %v868 = vadd.f32 0.0, %v867
        %v869 = vpop.f32.mrf.mxu0
        %v870 = vpop.f32.mrf.mxu0
        %v871 = vadd.f32 0.0, %v870
        %v872 = vpop.f32.mrf.mxu0
        %873 = vmatprep.mubr.bf16.mxu0 %v803
        %874 = vmatmul.mubr.bf16.gmra.mxu0 %v655
        %v875 = vpop.f32.mrf.mxu0
        %v876 = vadd.f32 0.0, %v875
        %v877 = vpop.f32.mrf.mxu0
        %v878 = vpop.f32.mrf.mxu0
        %v879 = vadd.f32 0.0, %v878
        %v880 = vpop.f32.mrf.mxu0
        %881 = vmatprep.mubr.bf16.mxu0 %v806
        %882 = vmatmul.mubr.bf16.gmra.mxu0 %v658
        %v883 = vpop.f32.mrf.mxu0
        %v884 = vadd.f32 0.0, %v883
        %v885 = vpop.f32.mrf.mxu0
        %v886 = vpop.f32.mrf.mxu0
        %v887 = vadd.f32 0.0, %v886
        %v888 = vpop.f32.mrf.mxu0
        %889 = vmatprep.mubr.bf16.mxu0 %v809
        %890 = vmatmul.mubr.bf16.gmra.mxu0 %v661
        %v891 = vpop.f32.mrf.mxu0
        %v892 = vadd.f32 0.0, %v891
        %v893 = vpop.f32.mrf.mxu0
        %v894 = vpop.f32.mrf.mxu0
        %v895 = vadd.f32 0.0, %v894
        %v896 = vpop.f32.mrf.mxu0
        %897 = vmatprep.mubr.bf16.mxu0 %v812
        %898 = vmatmul.mubr.bf16.gmra.mxu0 %v664
        %v899 = vpop.f32.mrf.mxu0
        %v900 = vadd.f32 0.0, %v899
        %v901 = vpop.f32.mrf.mxu0
        %v902 = vpop.f32.mrf.mxu0
        %v903 = vadd.f32 0.0, %v902
        %v904 = vpop.f32.mrf.mxu0
        %905 = vmatprep.mubr.bf16.mxu0 %v815
        %906 = vmatmul.mubr.bf16.gmra.mxu0 %v667
        %v907 = vpop.f32.mrf.mxu0
        %v908 = vadd.f32 0.0, %v907
        %v909 = vpop.f32.mrf.mxu0
        %v910 = vpop.f32.mrf.mxu0
        %v911 = vadd.f32 0.0, %v910
        %v912 = vpop.f32.mrf.mxu0
        %913 = vdwg.mxu0
        %v938 = vunpack.c.l.b16 %v672
        %v939 = vunpack.c.l.b16 %v673
        %v940 = vunpack.c.l.b16 %v674
        %v941 = vunpack.c.l.b16 %v675
        %v942 = vunpack.c.l.b16 %v676
        %v943 = vunpack.c.l.b16 %v677
        %v944 = vunpack.c.l.b16 %v678
        %v945 = vunpack.c.l.b16 %v679
        %v946 = vunpack.c.l.b16 %v680
        %v947 = vunpack.c.l.b16 %v681
        %v948 = vunpack.c.l.b16 %v682
        %v949 = vunpack.c.l.b16 %v683
        %v950 = vunpack.c.l.b16 %v684
        %v951 = vunpack.c.l.b16 %v685
        %v952 = vunpack.c.l.b16 %v686
        %v953 = vunpack.c.l.b16 %v687
        %v954 = vunpack.c.l.b16 %v688
        %v955 = vunpack.c.l.b16 %v689
        %v956 = vunpack.c.l.b16 %v690
        %v957 = vunpack.c.l.b16 %v691
        %v958 = vunpack.c.l.b16 %v692
        %v959 = vunpack.c.l.b16 %v693
        %v960 = vunpack.c.l.b16 %v694
        %v961 = vunpack.c.l.b16 %v695
        %v962 = vpack.c.b16 %v939, %v938
        %v963 = vpack.c.b16 %v941, %v940
        %v964 = vpack.c.b16 %v943, %v942
        %v965 = vpack.c.b16 %v945, %v944
        %v966 = vpack.c.b16 %v947, %v946
        %v967 = vpack.c.b16 %v949, %v948
        %v968 = vpack.c.b16 %v951, %v950
        %v969 = vpack.c.b16 %v953, %v952
        %v970 = vpack.c.b16 %v955, %v954
        %v971 = vpack.c.b16 %v957, %v956
        %v972 = vpack.c.b16 %v959, %v958
        %v973 = vpack.c.b16 %v961, %v960
        %v987 = vsel %vm641, %v613, 0
        %989 = vmatprep.subr.bf16.mxu0 0
        %990 = vmatpush1.bf16.msra.mxu0 %v969
        %991 = vmatprep.subr.bf16.mxu0 0
        %992 = vmatpush1.bf16.msra.mxu0 %v968
        %993 = vmatprep.subr.bf16.mxu0 0
        %994 = vmatpush1.bf16.msra.mxu0 %v967
        %995 = vmatprep.subr.bf16.mxu0 0
        %996 = vmatpush1.bf16.msra.mxu0 %v966
        %997 = vmatprep.subr.bf16.mxu0 0
        %998 = vmatpush1.bf16.msra.mxu0 %v965
        %999 = vmatprep.subr.bf16.mxu0 0
        %1000 = vmatpush1.bf16.msra.mxu0 %v964
        %1001 = vmatprep.subr.bf16.mxu0 0
        %1002 = vmatpush1.bf16.msra.mxu0 %v963
        %1003 = vmatprep.subr.bf16.mxu0 0
        %1004 = vmatpush1.bf16.msra.mxu0 %v962
        %1005 = vmatprep.subr.bf16.mxu0 0
        %1006 = vmatpush2.bf16.msra.mxu0 0
        %1007 = vmatprep.subr.bf16.mxu0 0
        %1008 = vmatpush2.bf16.msra.mxu0 0
        %1009 = vmatprep.subr.bf16.mxu0 0
        %1010 = vmatpush2.bf16.msra.mxu0 0
        %1011 = vmatprep.subr.bf16.mxu0 0
        %1012 = vmatpush2.bf16.msra.mxu0 0
        %1013 = vmatprep.subr.bf16.mxu0 0
        %1014 = vmatpush2.bf16.msra.mxu0 %v973
        %1015 = vmatprep.subr.bf16.mxu0 0
        %1016 = vmatpush2.bf16.msra.mxu0 %v972
        %1017 = vmatprep.subr.bf16.mxu0 0
        %1018 = vmatpush2.bf16.msra.mxu0 %v971
        %1019 = vmatprep.subr.bf16.mxu0 0
        %1020 = vmatpush2.bf16.msra.mxu0 %v970
        %1021 = vmatprep.mubr.bf16.mxu0 %v987
        %1022 = vmatmul.mubr.bf16.gmra.mxu0 %v643
        %v1023 = vpop.f32.mrf.mxu0
        %v1024 = vadd.f32 %v852, %v1023
        %v1025 = vpop.f32.mrf.mxu0
        %v1026 = vpop.f32.mrf.mxu0
        %v1027 = vadd.f32 %v855, %v1026
        %v1028 = vpop.f32.mrf.mxu0
        %1029 = vmatprep.mubr.bf16.mxu0 %v794
        %1030 = vmatmul.mubr.bf16.gmra.mxu0 %v646
        %v1031 = vpop.f32.mrf.mxu0
        %v1032 = vadd.f32 %v860, %v1031
        %v1033 = vpop.f32.mrf.mxu0
        %v1034 = vpop.f32.mrf.mxu0
        %v1035 = vadd.f32 %v863, %v1034
        %v1036 = vpop.f32.mrf.mxu0
        %1037 = vmatprep.mubr.bf16.mxu0 %v797
        %1038 = vmatmul.mubr.bf16.gmra.mxu0 %v649
        %v1039 = vpop.f32.mrf.mxu0
        %v1040 = vadd.f32 %v868, %v1039
        %v1041 = vpop.f32.mrf.mxu0
        %v1042 = vpop.f32.mrf.mxu0
        %v1043 = vadd.f32 %v871, %v1042
        %v1044 = vpop.f32.mrf.mxu0
        %1045 = vmatprep.mubr.bf16.mxu0 %v800
        %1046 = vmatmul.mubr.bf16.gmra.mxu0 %v652
        %v1047 = vpop.f32.mrf.mxu0
        %v1048 = vadd.f32 %v876, %v1047
        %v1049 = vpop.f32.mrf.mxu0
        %v1050 = vpop.f32.mrf.mxu0
        %v1051 = vadd.f32 %v879, %v1050
        %v1052 = vpop.f32.mrf.mxu0
        %1053 = vmatprep.mubr.bf16.mxu0 %v803
        %1054 = vmatmul.mubr.bf16.gmra.mxu0 %v655
        %v1055 = vpop.f32.mrf.mxu0
        %v1056 = vadd.f32 %v884, %v1055
        %v1057 = vpop.f32.mrf.mxu0
        %v1058 = vpop.f32.mrf.mxu0
        %v1059 = vadd.f32 %v887, %v1058
        %v1060 = vpop.f32.mrf.mxu0
        %1061 = vmatprep.mubr.bf16.mxu0 %v806
        %1062 = vmatmul.mubr.bf16.gmra.mxu0 %v658
        %v1063 = vpop.f32.mrf.mxu0
        %v1064 = vadd.f32 %v892, %v1063
        %v1065 = vpop.f32.mrf.mxu0
        %v1066 = vpop.f32.mrf.mxu0
        %v1067 = vadd.f32 %v895, %v1066
        %v1068 = vpop.f32.mrf.mxu0
        %1069 = vmatprep.mubr.bf16.mxu0 %v809
        %1070 = vmatmul.mubr.bf16.gmra.mxu0 %v661
        %v1071 = vpop.f32.mrf.mxu0
        %v1072 = vadd.f32 %v900, %v1071
        %v1073 = vpop.f32.mrf.mxu0
        %v1074 = vpop.f32.mrf.mxu0
        %v1075 = vadd.f32 %v903, %v1074
        %v1076 = vpop.f32.mrf.mxu0
        %1077 = vmatprep.mubr.bf16.mxu0 %v812
        %1078 = vmatmul.mubr.bf16.gmra.mxu0 %v664
        %v1079 = vpop.f32.mrf.mxu0
        %v1080 = vadd.f32 %v908, %v1079
        %v1081 = vpop.f32.mrf.mxu0
        %v1082 = vpop.f32.mrf.mxu0
        %v1083 = vadd.f32 %v911, %v1082
        %v1084 = vpop.f32.mrf.mxu0
        %1085 = vdwg.mxu0
        %s1086 = scalar_lea.vmem %s3, 192
        %v1087 = vld [vmem:[%s1086] sm:$0xf]
        %v1088 = vld [vmem:[%s1086 + $0x4] sm:$0xf]
        %v1089 = vld [vmem:[%s1086 + $0x8] sm:$0xf]
        %v1090 = vld [vmem:[%s1086 + $0xc] sm:$0xf]
        %v1091 = vld [vmem:[%s1086 + $0x10] sm:$0xf]
        %v1092 = vld [vmem:[%s1086 + $0x14] sm:$0xf]
        %v1093 = vld [vmem:[%s1086 + $0x18] sm:$0xf]
        %v1094 = vld [vmem:[%s1086 + $0x1c] sm:$0xf]
        %v1095 = vld [vmem:[%s1086 + $0x20] sm:$0xf]
        %v1096 = vld [vmem:[%s1086 + $0x24] sm:$0xf]
        %v1097 = vld [vmem:[%s1086 + $0x28] sm:$0xf]
        %v1098 = vld [vmem:[%s1086 + $0x2c] sm:$0xf]
        %v1099 = vld [vmem:[%s1086 + $0x30] sm:$0xf]
        %v1100 = vld [vmem:[%s1086 + $0x34] sm:$0xf]
        %v1101 = vld [vmem:[%s1086 + $0x38] sm:$0xf]
        %v1102 = vld [vmem:[%s1086 + $0x3c] sm:$0xf]
        %v1103 = vld [vmem:[%s1086 + $0x40] sm:$0xf]
        %v1104 = vld [vmem:[%s1086 + $0x44] sm:$0xf]
        %v1105 = vld [vmem:[%s1086 + $0x48] sm:$0xf]
        %v1106 = vld [vmem:[%s1086 + $0x4c] sm:$0xf]
        %v1107 = vld [vmem:[%s1086 + $0x50] sm:$0xf]
        %v1108 = vld [vmem:[%s1086 + $0x54] sm:$0xf]
        %v1109 = vld [vmem:[%s1086 + $0x58] sm:$0xf]
        %v1110 = vld [vmem:[%s1086 + $0x5c] sm:$0xf]
        %v1135 = vunpack.c.l.b16 %v1087
        %v1136 = vunpack.c.l.b16 %v1088
        %v1137 = vunpack.c.l.b16 %v1089
        %v1138 = vunpack.c.l.b16 %v1090
        %v1139 = vunpack.c.l.b16 %v1091
        %v1140 = vunpack.c.l.b16 %v1092
        %v1141 = vunpack.c.l.b16 %v1093
        %v1142 = vunpack.c.l.b16 %v1094
        %v1143 = vunpack.c.l.b16 %v1095
        %v1144 = vunpack.c.l.b16 %v1096
        %v1145 = vunpack.c.l.b16 %v1097
        %v1146 = vunpack.c.l.b16 %v1098
        %v1147 = vunpack.c.l.b16 %v1099
        %v1148 = vunpack.c.l.b16 %v1100
        %v1149 = vunpack.c.l.b16 %v1101
        %v1150 = vunpack.c.l.b16 %v1102
        %v1151 = vunpack.c.l.b16 %v1103
        %v1152 = vunpack.c.l.b16 %v1104
        %v1153 = vunpack.c.l.b16 %v1105
        %v1154 = vunpack.c.l.b16 %v1106
        %v1155 = vunpack.c.l.b16 %v1107
        %v1156 = vunpack.c.l.b16 %v1108
        %v1157 = vunpack.c.l.b16 %v1109
        %v1158 = vunpack.c.l.b16 %v1110
        %v1159 = vpack.c.b16 %v1136, %v1135
        %v1160 = vpack.c.b16 %v1138, %v1137
        %v1161 = vpack.c.b16 %v1140, %v1139
        %v1162 = vpack.c.b16 %v1142, %v1141
        %v1163 = vpack.c.b16 %v1144, %v1143
        %v1164 = vpack.c.b16 %v1146, %v1145
        %v1165 = vpack.c.b16 %v1148, %v1147
        %v1166 = vpack.c.b16 %v1150, %v1149
        %v1167 = vpack.c.b16 %v1152, %v1151
        %v1168 = vpack.c.b16 %v1154, %v1153
        %v1169 = vpack.c.b16 %v1156, %v1155
        %v1170 = vpack.c.b16 %v1158, %v1157
        %v1184 = vsel %vm641, %v640, 0
        %1186 = vmatprep.subr.bf16.mxu0 0
        %1187 = vmatpush1.bf16.msra.mxu0 %v1166
        %1188 = vmatprep.subr.bf16.mxu0 0
        %1189 = vmatpush1.bf16.msra.mxu0 %v1165
        %1190 = vmatprep.subr.bf16.mxu0 0
        %1191 = vmatpush1.bf16.msra.mxu0 %v1164
        %1192 = vmatprep.subr.bf16.mxu0 0
        %1193 = vmatpush1.bf16.msra.mxu0 %v1163
        %1194 = vmatprep.subr.bf16.mxu0 0
        %1195 = vmatpush1.bf16.msra.mxu0 %v1162
        %1196 = vmatprep.subr.bf16.mxu0 0
        %1197 = vmatpush1.bf16.msra.mxu0 %v1161
        %1198 = vmatprep.subr.bf16.mxu0 0
        %1199 = vmatpush1.bf16.msra.mxu0 %v1160
        %1200 = vmatprep.subr.bf16.mxu0 0
        %1201 = vmatpush1.bf16.msra.mxu0 %v1159
        %1202 = vmatprep.subr.bf16.mxu0 0
        %1203 = vmatpush2.bf16.msra.mxu0 0
        %1204 = vmatprep.subr.bf16.mxu0 0
        %1205 = vmatpush2.bf16.msra.mxu0 0
        %1206 = vmatprep.subr.bf16.mxu0 0
        %1207 = vmatpush2.bf16.msra.mxu0 0
        %1208 = vmatprep.subr.bf16.mxu0 0
        %1209 = vmatpush2.bf16.msra.mxu0 0
        %1210 = vmatprep.subr.bf16.mxu0 0
        %1211 = vmatpush2.bf16.msra.mxu0 %v1170
        %1212 = vmatprep.subr.bf16.mxu0 0
        %1213 = vmatpush2.bf16.msra.mxu0 %v1169
        %1214 = vmatprep.subr.bf16.mxu0 0
        %1215 = vmatpush2.bf16.msra.mxu0 %v1168
        %1216 = vmatprep.subr.bf16.mxu0 0
        %1217 = vmatpush2.bf16.msra.mxu0 %v1167
        %1218 = vmatprep.mubr.bf16.mxu0 %v797
        %1219 = vmatmul.mubr.bf16.gmra.mxu0 %v649
        %v1220 = vpop.f32.mrf.mxu0
        %v1221 = vadd.f32 0.0, %v1220
        %v1222 = vpop.f32.mrf.mxu0
        %v1223 = vpop.f32.mrf.mxu0
        %v1224 = vadd.f32 0.0, %v1223
        %v1225 = vpop.f32.mrf.mxu0
        %1226 = vmatprep.mubr.bf16.mxu0 %v800
        %1227 = vmatmul.mubr.bf16.gmra.mxu0 %v652
        %v1228 = vpop.f32.mrf.mxu0
        %v1229 = vadd.f32 0.0, %v1228
        %v1230 = vpop.f32.mrf.mxu0
        %v1231 = vpop.f32.mrf.mxu0
        %v1232 = vadd.f32 0.0, %v1231
        %v1233 = vpop.f32.mrf.mxu0
        %1234 = vmatprep.mubr.bf16.mxu0 %v803
        %1235 = vmatmul.mubr.bf16.gmra.mxu0 %v655
        %v1236 = vpop.f32.mrf.mxu0
        %v1237 = vadd.f32 0.0, %v1236
        %v1238 = vpop.f32.mrf.mxu0
        %v1239 = vpop.f32.mrf.mxu0
        %v1240 = vadd.f32 0.0, %v1239
        %v1241 = vpop.f32.mrf.mxu0
        %1242 = vmatprep.mubr.bf16.mxu0 %v806
        %1243 = vmatmul.mubr.bf16.gmra.mxu0 %v658
        %v1244 = vpop.f32.mrf.mxu0
        %v1245 = vadd.f32 0.0, %v1244
        %v1246 = vpop.f32.mrf.mxu0
        %v1247 = vpop.f32.mrf.mxu0
        %v1248 = vadd.f32 0.0, %v1247
        %v1249 = vpop.f32.mrf.mxu0
        %1250 = vmatprep.mubr.bf16.mxu0 %v809
        %1251 = vmatmul.mubr.bf16.gmra.mxu0 %v661
        %v1252 = vpop.f32.mrf.mxu0
        %v1253 = vadd.f32 0.0, %v1252
        %v1254 = vpop.f32.mrf.mxu0
        %v1255 = vpop.f32.mrf.mxu0
        %v1256 = vadd.f32 0.0, %v1255
        %v1257 = vpop.f32.mrf.mxu0
        %1258 = vmatprep.mubr.bf16.mxu0 %v812
        %1259 = vmatmul.mubr.bf16.gmra.mxu0 %v664
        %v1260 = vpop.f32.mrf.mxu0
        %v1261 = vadd.f32 0.0, %v1260
        %v1262 = vpop.f32.mrf.mxu0
        %v1263 = vpop.f32.mrf.mxu0
        %v1264 = vadd.f32 0.0, %v1263
        %v1265 = vpop.f32.mrf.mxu0
        %1266 = vmatprep.mubr.bf16.mxu0 %v815
        %1267 = vmatmul.mubr.bf16.gmra.mxu0 %v667
        %v1268 = vpop.f32.mrf.mxu0
        %v1269 = vadd.f32 0.0, %v1268
        %v1270 = vpop.f32.mrf.mxu0
        %v1271 = vpop.f32.mrf.mxu0
        %v1272 = vadd.f32 0.0, %v1271
        %v1273 = vpop.f32.mrf.mxu0
        %1274 = vmatprep.mubr.bf16.mxu0 %v1184
        %1275 = vmatmul.mubr.bf16.gmra.mxu0 %v670
        %v1276 = vpop.f32.mrf.mxu0
        %v1277 = vadd.f32 0.0, %v1276
        %v1278 = vpop.f32.mrf.mxu0
        %v1279 = vpop.f32.mrf.mxu0
        %v1280 = vadd.f32 0.0, %v1279
        %v1281 = vpop.f32.mrf.mxu0
        %1282 = vdwg.mxu0
        %v1283 = vadd.f32 %v1024, %v1221
        %v1284 = vadd.f32 %v1027, %v1224
        %v1285 = vadd.f32 %v1032, %v1229
        %v1286 = vadd.f32 %v1035, %v1232
        %v1287 = vadd.f32 %v1040, %v1237
        %v1288 = vadd.f32 %v1043, %v1240
        %v1289 = vadd.f32 %v1048, %v1245
        %v1290 = vadd.f32 %v1051, %v1248
        %v1291 = vadd.f32 %v1056, %v1253
        %v1292 = vadd.f32 %v1059, %v1256
        %v1293 = vadd.f32 %v1064, %v1261
        %v1294 = vadd.f32 %v1067, %v1264
        %v1295 = vadd.f32 %v1072, %v1269
        %v1296 = vadd.f32 %v1075, %v1272
        %v1297 = vadd.f32 %v1080, %v1277
        %v1298 = vadd.f32 %v1083, %v1280
        %v1299 = vmax.f32 %v1283, 0.0
        %v1300 = vmax.f32 %v1284, 0.0
        %v1301 = vmax.f32 %v1285, 0.0
        %v1302 = vmax.f32 %v1286, 0.0
        %v1303 = vmax.f32 %v1287, 0.0
        %v1304 = vmax.f32 %v1288, 0.0
        %v1305 = vmax.f32 %v1289, 0.0
        %v1306 = vmax.f32 %v1290, 0.0
        %v1307 = vmax.f32 %v1291, 0.0
        %v1308 = vmax.f32 %v1292, 0.0
        %v1309 = vmax.f32 %v1293, 0.0
        %v1310 = vmax.f32 %v1294, 0.0
        %v1311 = vmax.f32 %v1295, 0.0
        %v1312 = vmax.f32 %v1296, 0.0
        %v1313 = vmax.f32 %v1297, 0.0
        %v1314 = vmax.f32 %v1298, 0.0
        %1315 = vst.msk [vmem:[%s307] sm:$0xff] %vm641, %v1299
        %1316 = vst.msk [vmem:[%s307 + $0x8] sm:$0xff] %vm641, %v1300
        %1317 = vst.msk [vmem:[%s307 + $0x10] sm:$0xff] %vm641, %v1301
        %1318 = vst.msk [vmem:[%s307 + $0x18] sm:$0xff] %vm641, %v1302
        %1319 = vst.msk [vmem:[%s307 + $0x20] sm:$0xff] %vm641, %v1303
        %1320 = vst.msk [vmem:[%s307 + $0x28] sm:$0xff] %vm641, %v1304
        %1321 = vst.msk [vmem:[%s307 + $0x30] sm:$0xff] %vm641, %v1305
        %1322 = vst.msk [vmem:[%s307 + $0x38] sm:$0xff] %vm641, %v1306
        %1323 = vst.msk [vmem:[%s307 + $0x40] sm:$0xff] %vm641, %v1307
        %1324 = vst.msk [vmem:[%s307 + $0x48] sm:$0xff] %vm641, %v1308
        %1325 = vst.msk [vmem:[%s307 + $0x50] sm:$0xff] %vm641, %v1309
        %1326 = vst.msk [vmem:[%s307 + $0x58] sm:$0xff] %vm641, %v1310
        %1327 = vst.msk [vmem:[%s307 + $0x60] sm:$0xff] %vm641, %v1311
        %1328 = vst.msk [vmem:[%s307 + $0x68] sm:$0xff] %vm641, %v1312
        %1329 = vst.msk [vmem:[%s307 + $0x70] sm:$0xff] %vm641, %v1313
        %1330 = vst.msk [vmem:[%s307 + $0x78] sm:$0xff] %vm641, %v1314
        %s1331 = sand.u32 %s155, 1
        %s1332 = scalar_lea.sflag [#allocation3], %s1331
        %s1333 = sand.u32 %s155, 1
        %s1334 = smul.addr %s1333, 128
        %s1335 = scalar_lea.vmem [#allocation2], %s1334
        // Predicated region
        $region37: #{tpu_custom_call.1} parent=35 // pred_check
          %p1336 = pneg %p165
        $region38: #{tpu_custom_call.1} parent=35 // pred_check_branch
          %1338 = sbr.rel (%p1336) target = $region40
        $region39: #{tpu_custom_call.1} parent=35 // pred_region
          %s1339 = smul.u32 8, %s23
          %s1341 = ssub.s32 2048, 2048
          %1342 = vsyncadd %s1332, %s1341
          %s1343 = smul.addr %s1339, 2
          %s1344 = smul.addr %s22, 32
          %s1345 = sadd.s32 %s1343, %s1344
          %s1346 = smul.addr %s1345, 128
          %s1347 = scalar_lea.hbm %s4, %s1346
          %s1348 = sshll.u32 %s1335, 4
          %s1349 = int_to_ptr.vmem [resolvable:$true] %s1348
          %1354 = dma.vmem_to_hbm [thread:$0]  %s1349, 2048, %s1347, %s1332, 128, 128, 8
        $region40: #{tpu_custom_call.1} parent=35 // pred_fallthru
          _
      $region36: #{tpu_custom_call.1} parent=5 // pred_fallthru
        _
      %p1355 = scmp.le.s32.totalorder 2, %s13
      // Predicated region
      $region41: #{tpu_custom_call.1} parent=5 // pred_check
        %p1356 = pneg %p1355
      $region42: #{tpu_custom_call.1} parent=5 // pred_check_branch
        %1358 = sbr.rel (%p1356) target = $region44
      $region43: #{tpu_custom_call.1} parent=5 // pred_region
        %s1359 = ssub.s32 %s13, 2
        // Predicated region
        $region45: #{tpu_custom_call.1} parent=43 // pred_check
          %p1360 = pneg %p171
        $region46: #{tpu_custom_call.1} parent=43 // pred_check_branch
          %1362 = sbr.rel (%p1360) target = $region48
        $region47: #{tpu_custom_call.1} parent=43 // pred_region
          %s1363 = sand.u32 %s156, 1
          %s1364 = scalar_lea.sflag [#allocation3], %s1363
          %s1365 = sand.u32 %s156, 1
          %s1366 = smul.addr %s1365, 128
          %s1367 = scalar_lea.vmem [#allocation2], %s1366
          %1368 = dma.done %s1364, 2048
        $region48: #{tpu_custom_call.1} parent=43 // pred_fallthru
          _
      $region44: #{tpu_custom_call.1} parent=5 // pred_fallthru
        _
    $region6: #{tpu_custom_call.1} parent=1 // loop_footer
      %s17 = sadd.s32 1, %s13
    $region7: #{tpu_custom_call.1} parent=1 // loop_footer_branch
      %12 = sbr.rel target = $region3
    $region8: #{tpu_custom_call.1} parent=1 // loop_exit
      _
    %1369 = vsyncpa [#allocation3], 1
    %s1370 = scalar_lea.sflag [#allocation3], 1
    %1371 = vsyncpa %s1370, 1

</llo_original>
